<compile_context>
chip_gen: v7x
topology: tpu7x:2x2x1
jax: 0.10.0
libtpu: 0.0.40
codegen_flags: <defaults>
</compile_context>

<pallas_src>
import functools

import jax
import jax.numpy as jnp
from jax.experimental import pallas as pl
from jax.experimental.pallas import tpu as pltpu

INIT_L = 0.0
THRESHOLD = 0.5


def _round_up(n: int, m: int) -> int:
    return ((n + m - 1) // m) * m


def _pick_tile(dim: int, align: int, cap: int) -> int:
    """Largest multiple of `align`, <= cap, that divides round_up(dim, align)."""
    padded = _round_up(dim, align)
    best = align
    t = align
    limit = min(cap, padded)
    while t <= limit:
        if padded % t == 0:
            best = t
        t += align
    return best


def _disjunction_kernel_single_k(x_ref, w_ref, o_ref):
    """Whole feature dim in one tile: no accumulator, no init/finalize."""
    res = jnp.dot(x_ref[...], w_ref[...], preferred_element_type=jnp.float32)
    o_ref[...] = (res > 0.0).astype(o_ref.dtype)


def _disjunction_kernel_multi_k(x_ref, w_ref, o_ref, acc_ref):
    """Binary-path matmul with reduction over the K (feature) grid axis."""
    k = pl.program_id(2)

    @pl.when(k == 0)
    def _():
        acc_ref[...] = jnp.zeros_like(acc_ref)

    # bf16 x bf16 -> f32 accumulate on the MXU.
    acc_ref[...] += jnp.dot(x_ref[...], w_ref[...],
                            preferred_element_type=jnp.float32)

    @pl.when(k == pl.num_programs(2) - 1)
    def _():
        o_ref[...] = (acc_ref[...] > 0.0).astype(o_ref.dtype)


def disjunction_forward(inputs, weights, binary_weights=None,
                        out_dtype=jnp.float32):
    """Pallas implementation of DisjunctionLayer.forward (value path).

    inputs        : [B, F] float (RRL inputs live in [0, 1], i.e. >= 0)
    weights       : [F, D] float raw (continuous) weights
    binary_weights: optional precomputed (weights > 0.5) array, any float dtype;
                    pass it to avoid re-binarizing every call.
    returns       : [B, D] out_dtype array with values in {0, 1}
    """
    B, F = inputs.shape
    F2, D = weights.shape
    assert F == F2

    # Binarize weights once (sigmoid(w - 0.5) > 0.5  <=>  w > 0.5, monotone).
    if binary_weights is None:
        bin_w = (weights > THRESHOLD).astype(jnp.bfloat16)
    else:
        bin_w = binary_weights.astype(jnp.bfloat16)
    x = inputs.astype(jnp.bfloat16)

    # Minimally rounded (hardware-aligned) dims and divisor tile sizes.
    Bp = _round_up(B, 16)      # bf16 packs 16 rows / vreg sublane group
    Dp = _round_up(D, 128)     # lane-dense output
    Fp = _round_up(F, 128)
    tm = _pick_tile(B, 16, 512)
    tn = _pick_tile(D, 128, 512)
    tk = _pick_tile(F, 128, 2048)

    # Give both v7x TensorCores work when possible (prefer splitting D).
    while (Bp // tm) * (Dp // tn) < 2 and tn % 256 == 0:
        tn //= 2

    # Pad only if actually needed (skips 1-3 extra full HBM passes otherwise).
    if (Bp, Fp) != (B, F):
        x = jnp.pad(x, ((0, Bp - B), (0, Fp - F)))
    if (Fp, Dp) != (F, D):
        bin_w = jnp.pad(bin_w, ((0, Fp - F), (0, Dp - D)))

    cost = pl.CostEstimate(
        flops=2 * Bp * Fp * Dp,
        transcendentals=0,
        bytes_accessed=(Bp * Fp * 2 + Fp * Dp * 2
                        + Bp * Dp * jnp.dtype(out_dtype).itemsize),
    )
    out_shape = jax.ShapeDtypeStruct((Bp, Dp), out_dtype)
    vmem_limit = 32 * 1024 * 1024  # safe on v5e/v6e (128 MiB) and v7x (64 MiB)

    if Fp == tk:
        # Single-K fast path: 2-D grid, no scratch accumulator.
        out = pl.pallas_call(
            _disjunction_kernel_single_k,
            out_shape=out_shape,
            grid_spec=pltpu.PrefetchScalarGridSpec(
                num_scalar_prefetch=0,
                grid=(Bp // tm, Dp // tn),
                in_specs=[
                    pl.BlockSpec((tm, Fp), lambda i, j: (i, 0)),
                    pl.BlockSpec((Fp, tn), lambda i, j: (0, j)),
                ],
                out_specs=pl.BlockSpec((tm, tn), lambda i, j: (i, j)),
            ),
            compiler_params=pltpu.CompilerParams(
                dimension_semantics=("parallel", "parallel"),
                vmem_limit_bytes=vmem_limit),
            cost_estimate=cost,
        )(x, bin_w)
    else:
        out = pl.pallas_call(
            _disjunction_kernel_multi_k,
            out_shape=out_shape,
            grid_spec=pltpu.PrefetchScalarGridSpec(
                num_scalar_prefetch=0,
                grid=(Bp // tm, Dp // tn, Fp // tk),
                in_specs=[
                    pl.BlockSpec((tm, tk), lambda i, j, k: (i, k)),
                    pl.BlockSpec((tk, tn), lambda i, j, k: (k, j)),
                ],
                out_specs=pl.BlockSpec((tm, tn), lambda i, j, k: (i, j)),
                scratch_shapes=[pltpu.VMEM((tm, tn), jnp.float32)],
            ),
            compiler_params=pltpu.CompilerParams(
                dimension_semantics=("parallel", "parallel", "arbitrary"),
                vmem_limit_bytes=vmem_limit),
            cost_estimate=cost,
        )(x, bin_w)

    if (Bp, Dp) != (B, D):
        out = out[:B, :D]
    return out


def _reference_forward(inputs, weights):
    """Plain-JAX (f32) reference of the PyTorch forward value path."""
    bin_w = (jax.nn.sigmoid(weights - THRESHOLD) > 0.5).astype(jnp.float32)
    res = inputs @ bin_w
    return jnp.where(res > 0.0, 1.0, 0.0)


if __name__ == "__main__":
    key = jax.random.PRNGKey(0)
    k_x, k_w = jax.random.split(key)

    batch = 8
    input_shape = 32        # feature dim F
    num_disjunctions = 16   # output dim D

    # RRL disjunction inputs live in [0, 1].
    x = jax.random.uniform(k_x, (batch, input_shape), dtype=jnp.float32)

    # Case 1: module-matching init, weights in [INIT_L, 0.5) -> all binary
    # weights are 0 -> output is all zeros.
    w_init = INIT_L + (0.5 - INIT_L) * jax.random.uniform(
        k_w, (input_shape, num_disjunctions), dtype=jnp.float32)

    # Case 2: weights spread over [0, 1) so binarization / matmul is nontrivial.
    w_spread = jax.random.uniform(
        k_w, (input_shape, num_disjunctions), dtype=jnp.float32)

    fwd = jax.jit(functools.partial(disjunction_forward, out_dtype=jnp.float32))

    for w in (w_init, w_spread):
        out = jax.block_until_ready(fwd(x, w))
        ref = _reference_forward(x, w)
        assert out.shape == (batch, num_disjunctions)
        assert out.dtype == jnp.float32
        assert jnp.array_equal(out, ref), "Pallas output mismatch vs reference"

    print("KERNEL_OK")
</pallas_src>

<mosaic_0001>
module attributes {stable_mosaic.version = 11 : i64} {
  func.func @_disjunction_kernel_single_k(%arg0: i32, %arg1: i32, %arg2: memref<16x128xbf16, #tpu.memory_space<vmem>>, %arg3: memref<128x128xbf16, #tpu.memory_space<vmem>>, %arg4: memref<16x128xf32, #tpu.memory_space<vmem>>) attributes {dimension_semantics = [#tpu.dimension_semantics<parallel>, #tpu.dimension_semantics<parallel>], iteration_bounds = array<i64: 1, 1>, scalar_prefetch = 0 : i64, scratch_operands = 0 : i64, tpu.core_type = #tpu.core_type<tc>, window_params = [{transform_indices = @transform_0, window_bounds = array<i64: 16, 128>}, {transform_indices = @transform_1, window_bounds = array<i64: 128, 128>}, {transform_indices = @transform_2, window_bounds = array<i64: 16, 128>}]} {
    %c0 = arith.constant 0 : index
    %c0_0 = arith.constant 0 : index
    %0 = vector.load %arg2[%c0, %c0_0] : memref<16x128xbf16, #tpu.memory_space<vmem>>, vector<16x128xbf16>
    %c0_1 = arith.constant 0 : index
    %c0_2 = arith.constant 0 : index
    %1 = vector.load %arg3[%c0_1, %c0_2] : memref<128x128xbf16, #tpu.memory_space<vmem>>, vector<128x128xbf16>
    %cst = arith.constant dense<0.000000e+00> : vector<16x128xf32>
    %2 = tpu.matmul %0, %1, %cst {dimension_numbers = #tpu.dot_dimension_numbers<[1], [0], [0], [1], [0, 0, 1, 1], [], []>} : vector<16x128xbf16>, vector<128x128xbf16>, vector<16x128xf32> -> vector<16x128xf32>
    %cst_3 = arith.constant 0.000000e+00 : f32
    %3 = vector.broadcast %cst_3 : f32 to vector<16x128xf32>
    %4 = arith.cmpf ogt, %2, %3 : vector<16x128xf32>
    %5 = arith.extui %4 : vector<16x128xi1> to vector<16x128xi32>
    %6 = arith.sitofp %5 : vector<16x128xi32> to vector<16x128xf32>
    %c0_4 = arith.constant 0 : index
    %c0_5 = arith.constant 0 : index
    %7 = vector.load %arg4[%c0_4, %c0_5] : memref<16x128xf32, #tpu.memory_space<vmem>>, vector<16x128xf32>
    tpu.vector_store %arg4[%c0_4, %c0_5], %6 {strides = array<i32>} : memref<16x128xf32, #tpu.memory_space<vmem>>, vector<16x128xf32>,
    return
  }
  func.func @transform_0(%arg0: i32, %arg1: i32) -> (i32, i32) {
    %c0_i32 = arith.constant 0 : i32
    %c0_i32_0 = arith.constant 0 : i32
    return %arg0, %c0_i32 : i32, i32
  }
  func.func @transform_1(%arg0: i32, %arg1: i32) -> (i32, i32) {
    %c0_i32 = arith.constant 0 : i32
    %c0_i32_0 = arith.constant 0 : i32
    return %c0_i32, %arg1 : i32, i32
  }
  func.func @transform_2(%arg0: i32, %arg1: i32) -> (i32, i32) {
    %c0_i32 = arith.constant 0 : i32
    return %arg0, %arg1 : i32, i32
  }
}

</mosaic_0001>

<llo_original>
// kernel: disjunction_forward.1
$region0: #{disjunction_forward.1}
  #allocation0 [shape = 'u32[]', space=smem, size = 0x4, offset = 0x4, fixed_abs, tag = 'smem constant byte address 0x4 - core index']
  #allocation1 [shape = 'u32[144,128]{1,0:T(1,128)}', space=vmem, size = 0x12000, scoped, tag = 'internal scratch']
  %s0 = inlined_call_operand.vmem [shape: bf16[16,128], index: 0, kind: input, shape index: {}]
  %s1 = inlined_call_operand.vmem [shape: bf16[128,128], index: 1, kind: input, shape index: {}]
  %s2 = inlined_call_operand.vmem [shape: f32[16,128], index: 2, kind: output, shape index: {}]
  %s3 = sld [smem:[#allocation0]]
  $region18: #{disjunction_forward.1} parent=0
    _
  %s5 = ssub.s32 1, %s3
  %s6 = scalar_select 0, %s5, %s3
  // Predicated region
  $region2: #{disjunction_forward.1} parent=0 // pred_check
    _
  $region3: #{disjunction_forward.1} parent=0 // pred_check_branch
    %8 = sbr.rel (0) target = $region5
  $region4: #{disjunction_forward.1} parent=0 // pred_region
    _
  $region5: #{disjunction_forward.1} parent=0 // pred_fallthru
    _
  // Predicated region
  $region6: #{disjunction_forward.1} parent=0 // pred_check
    _
  $region7: #{disjunction_forward.1} parent=0 // pred_check_branch
    %10 = sbr.rel (0) target = $region9
  $region8: #{disjunction_forward.1} parent=0 // pred_region
    _
  $region9: #{disjunction_forward.1} parent=0 // pred_fallthru
    _
  %v12 = vld [vmem:[%s0] sm:$0xf]
  %v13 = vld [vmem:[%s0 + $0x4] sm:$0xf]
  %v14 = vld [vmem:[%s1] sm:$0xf]
  %v15 = vld [vmem:[%s1 + $0x4] sm:$0xf]
  %v16 = vld [vmem:[%s1 + $0x8] sm:$0xf]
  %v17 = vld [vmem:[%s1 + $0xc] sm:$0xf]
  %v18 = vld [vmem:[%s1 + $0x10] sm:$0xf]
  %v19 = vld [vmem:[%s1 + $0x14] sm:$0xf]
  %v20 = vld [vmem:[%s1 + $0x18] sm:$0xf]
  %v21 = vld [vmem:[%s1 + $0x1c] sm:$0xf]
  %v22 = vld [vmem:[%s1 + $0x20] sm:$0xf]
  %v23 = vld [vmem:[%s1 + $0x24] sm:$0xf]
  %v24 = vld [vmem:[%s1 + $0x28] sm:$0xf]
  %v25 = vld [vmem:[%s1 + $0x2c] sm:$0xf]
  %v26 = vld [vmem:[%s1 + $0x30] sm:$0xf]
  %v27 = vld [vmem:[%s1 + $0x34] sm:$0xf]
  %v28 = vld [vmem:[%s1 + $0x38] sm:$0xf]
  %v29 = vld [vmem:[%s1 + $0x3c] sm:$0xf]
  %v32 = vunpack.c.l.b16 %v12
  %v33 = vunpack.c.l.b16 %v13
  %v34 = vpack.c.b16 %v33, %v32
  %v52 = vunpack.c.l.b16 %v14
  %v53 = vunpack.c.l.b16 %v15
  %v54 = vunpack.c.l.b16 %v16
  %v55 = vunpack.c.l.b16 %v17
  %v56 = vunpack.c.l.b16 %v18
  %v57 = vunpack.c.l.b16 %v19
  %v58 = vunpack.c.l.b16 %v20
  %v59 = vunpack.c.l.b16 %v21
  %v60 = vunpack.c.l.b16 %v22
  %v61 = vunpack.c.l.b16 %v23
  %v62 = vunpack.c.l.b16 %v24
  %v63 = vunpack.c.l.b16 %v25
  %v64 = vunpack.c.l.b16 %v26
  %v65 = vunpack.c.l.b16 %v27
  %v66 = vunpack.c.l.b16 %v28
  %v67 = vunpack.c.l.b16 %v29
  %v68 = vpack.c.b16 %v53, %v52
  %v69 = vpack.c.b16 %v55, %v54
  %v70 = vpack.c.b16 %v57, %v56
  %v71 = vpack.c.b16 %v59, %v58
  %v72 = vpack.c.b16 %v61, %v60
  %v73 = vpack.c.b16 %v63, %v62
  %v74 = vpack.c.b16 %v65, %v64
  %v75 = vpack.c.b16 %v67, %v66
  %84 = vmatprep.subr.bf16.mxu0 0
  %85 = vmatpush1.bf16.msra.mxu0 %v68
  %86 = vmatprep.subr.bf16.mxu0 0
  %87 = vmatpush1.bf16.msra.mxu0 %v69
  %88 = vmatprep.subr.bf16.mxu0 0
  %89 = vmatpush1.bf16.msra.mxu0 %v70
  %90 = vmatprep.subr.bf16.mxu0 0
  %91 = vmatpush1.bf16.msra.mxu0 %v71
  %92 = vmatprep.subr.bf16.mxu0 0
  %93 = vmatpush1.bf16.msra.mxu0 %v72
  %94 = vmatprep.subr.bf16.mxu0 0
  %95 = vmatpush1.bf16.msra.mxu0 %v73
  %96 = vmatprep.subr.bf16.mxu0 0
  %97 = vmatpush1.bf16.msra.mxu0 %v74
  %98 = vmatprep.subr.bf16.mxu0 0
  %99 = vmatpush1.bf16.msra.mxu0 %v75
  %100 = vmatprep.subr.bf16.mxu0 0
  %101 = vmatpush1.bf16.msra.mxu0 0
  %102 = vmatprep.subr.bf16.mxu0 0
  %103 = vmatpush1.bf16.msra.mxu0 0
  %104 = vmatprep.subr.bf16.mxu0 0
  %105 = vmatpush1.bf16.msra.mxu0 0
  %106 = vmatprep.subr.bf16.mxu0 0
  %107 = vmatpush1.bf16.msra.mxu0 0
  %108 = vmatprep.subr.bf16.mxu0 0
  %109 = vmatpush1.bf16.msra.mxu0 0
  %110 = vmatprep.subr.bf16.mxu0 0
  %111 = vmatpush1.bf16.msra.mxu0 0
  %112 = vmatprep.subr.bf16.mxu0 0
  %113 = vmatpush1.bf16.msra.mxu0 0
  %114 = vmatprep.subr.bf16.mxu0 0
  %115 = vmatpush1.bf16.msra.mxu0 0
  %116 = vmatprep.mubr.bf16.mxu0 0
  %117 = vmatmul.mubr.bf16.gmra.mrb[0].mxu0 %v34
  %v118 = vpop.f32.mrb[0].mxu0
  %v119 = vadd.f32 0.0, %v118
  %v120 = vpop.f32.mrb[0].mxu0
  %v121 = vpop.f32.mrb[0].mxu0
  %v122 = vadd.f32 0.0, %v121
  %v123 = vpop.f32.mrb[0].mxu0
  %124 = vdwg.mxu0
  %vm125 = vcmp.gt.f32.partialorder %v119, 0.0
  %vm126 = vcmp.gt.f32.partialorder %v122, 0.0
  %v127 = vsel %vm125, 1, 0
  %v128 = vsel %vm126, 1, 0
  %v129 = vcvt.s32.f32 %v127
  %v130 = vcvt.s32.f32 %v128
  %131 = vst [vmem:[%s2] sm:$0xff] %v129
  %132 = vst [vmem:[%s2 + $0x8] sm:$0xff] %v130
  // Predicated region
  $region10: #{disjunction_forward.1} parent=0 // pred_check
    _
  $region11: #{disjunction_forward.1} parent=0 // pred_check_branch
    %134 = sbr.rel (0) target = $region13
  $region12: #{disjunction_forward.1} parent=0 // pred_region
    _
  $region13: #{disjunction_forward.1} parent=0 // pred_fallthru
    _
  // Predicated region
  $region14: #{disjunction_forward.1} parent=0 // pred_check
    _
  $region15: #{disjunction_forward.1} parent=0 // pred_check_branch
    %136 = sbr.rel (0) target = $region17
  $region16: #{disjunction_forward.1} parent=0 // pred_region
    _
  $region17: #{disjunction_forward.1} parent=0 // pred_fallthru
    _

</llo_original>
